<compile_context>
chip_gen: v7x
topology: tpu7x:2x2x1
jax: 0.10.0
libtpu: 0.0.40
codegen_flags: <defaults>
</compile_context>

<pallas_src>
import jax
import jax.numpy as jnp
from jax.experimental import pallas as pl
from jax.experimental.pallas import tpu as pltpu


def _round_up(x, m):
    return (x + m - 1) // m * m


# ---------------------------------------------------------------------------
# Fused kernel: DMA-gather embedding rows + chained Linear hops
# ---------------------------------------------------------------------------

def _make_fused_kernel(n_hops, routing, vocab, tm):
    """Builds a kernel closed over the (static) hop count / routing / tile size.

    Kernel ref layout:
      refs[0]                      : ids   (N_pad,) int32 in SMEM (scalar prefetch)
      refs[1]                      : table (V, D) in HBM (pl.ANY)
      refs[2 + 2h], refs[3 + 2h]   : W_h (Din, Dout), b_h (1, Dout) in VMEM
      refs[2+2n : 2+2n+1+n]        : outputs: emb tile + one tile per hop
      refs[-2], refs[-1]           : gather VMEM scratch (tm, D), DMA semaphore
    """

    def kernel(*refs):
        ids_ref = refs[0]
        table_hbm = refs[1]
        w_refs = [refs[2 + 2 * h] for h in range(n_hops)]
        b_refs = [refs[3 + 2 * h] for h in range(n_hops)]
        out_refs = list(refs[2 + 2 * n_hops: 2 + 2 * n_hops + 1 + n_hops])
        gather_buf = refs[-2]
        sem = refs[-1]

        base = pl.program_id(0) * tm

        # ---- gather tm embedding rows from the HBM table --------------------
        @pl.loop(0, tm)
        def _(t):
            row = ids_ref[base + t]
            row = jnp.minimum(jnp.maximum(row, 0), vocab - 1)  # clamp: no OOB DMA
            pltpu.make_async_copy(table_hbm.at[row], gather_buf.at[t], sem).start()

        @pl.loop(0, tm)
        def _(t):
            # every issued copy is exactly one row; wait with a matching descriptor
            pltpu.make_async_copy(table_hbm.at[0], gather_buf.at[0], sem).wait()

        emb = gather_buf[...]
        out_refs[0][...] = emb.astype(out_refs[0].dtype)

        # ---- fused vec2vec hops (weights VMEM-resident, f32 accumulation) ---
        outs = [emb.astype(jnp.float32)]
        for h in range(n_hops):
            src = outs[routing[h]]
            w = w_refs[h][...]
            y = jnp.dot(src.astype(w.dtype), w,
                        preferred_element_type=jnp.float32)
            y = y + b_refs[h][...].astype(jnp.float32)
            out_refs[h + 1][...] = y.astype(out_refs[h + 1].dtype)
            outs.append(y)

    return kernel


# ---------------------------------------------------------------------------
# MultiHopWordEmbedding (JAX/Pallas version)
# ---------------------------------------------------------------------------

class MultiHopWordEmbedding:
    def __init__(self, embed_table, vec2vec_params, routing=None, block_rows=256):
        # embed_table    : (V, D)
        # vec2vec_params : list of (W (Din, Dout), b (Dout,)) tuples
        # routing        : list of ints; hop i consumes outputs[routing[i]]
        if not isinstance(vec2vec_params, list):
            vec2vec_params = [vec2vec_params]
        if routing is None:
            routing = list(range(len(vec2vec_params)))
        self.embed_table = embed_table
        self.vec2vec_params = vec2vec_params
        self.routing = list(routing)
        self.block_rows = block_rows
        # TODO(synk): the PyTorch forward double-indexes `outputs` (a latent bug)
        # and list-valued routing entries are not supported here; the intended
        # single-hop routing (outputs[routing[i]] -> vec2vec[i]) is implemented.

    def forward(self, token_ids):
        b, s = token_ids.shape
        table = self.embed_table
        vocab, d = table.shape
        n = b * s
        n_hops = len(self.vec2vec_params)

        # token-tile size: multiple of 8 sublanes, up to block_rows
        tm = self.block_rows if n >= self.block_rows else _round_up(max(n, 8), 8)
        n_pad = _round_up(n, tm)
        grid = (n_pad // tm,)

        ids = token_ids.reshape(-1).astype(jnp.int32)
        if n_pad != n:
            ids = jnp.pad(ids, (0, n_pad - n))  # padded rows gather row 0 (discarded)

        kernel = _make_fused_kernel(n_hops, self.routing, vocab, tm)

        # inputs: table (HBM), then per-hop W and b (VMEM-resident blocks)
        param_args = []
        in_specs = [pl.BlockSpec(memory_space=pl.ANY)]
        for (w, bias) in self.vec2vec_params:
            din, dout = w.shape
            param_args.append(w)
            param_args.append(bias.reshape(1, dout))
            in_specs.append(pl.BlockSpec((din, dout), lambda i, ids_ref: (0, 0)))
            in_specs.append(pl.BlockSpec((1, dout), lambda i, ids_ref: (0, 0)))

        out_dims = [d] + [w.shape[1] for (w, _) in self.vec2vec_params]
        out_dtypes = [table.dtype] + [w.dtype for (w, _) in self.vec2vec_params]
        out_shapes = tuple(
            jax.ShapeDtypeStruct((n_pad, od), odt)
            for od, odt in zip(out_dims, out_dtypes)
        )
        out_specs = [
            pl.BlockSpec((tm, od), lambda i, ids_ref: (i, 0)) for od in out_dims
        ]

        flops = 2 * n_pad * sum(int(w.shape[0]) * int(w.shape[1])
                                for (w, _) in self.vec2vec_params)
        bytes_accessed = (
            n_pad * d * table.dtype.itemsize
            + sum(w.size * w.dtype.itemsize + bi.size * bi.dtype.itemsize
                  for (w, bi) in self.vec2vec_params)
            + sum(n_pad * od * odt.itemsize
                  for od, odt in zip(out_dims, out_dtypes))
        )

        outs = pl.pallas_call(
            kernel,
            out_shape=out_shapes,
            grid_spec=pltpu.PrefetchScalarGridSpec(
                num_scalar_prefetch=1,
                grid=grid,
                in_specs=in_specs,
                out_specs=out_specs,
                scratch_shapes=[
                    pltpu.VMEM((tm, d), table.dtype),   # gathered-rows buffer
                    pltpu.SemaphoreType.DMA,            # gather DMA semaphore
                ],
            ),
            compiler_params=pltpu.CompilerParams(
                dimension_semantics=("parallel",),      # shard token tiles across TCs
            ),
            cost_estimate=pl.CostEstimate(
                flops=flops, transcendentals=0, bytes_accessed=int(bytes_accessed)),
        )(ids, table, *param_args)

        return [o[:n].reshape(b, s, -1) for o in outs]


# ---------------------------------------------------------------------------
# Pure-JAX reference for verification
# ---------------------------------------------------------------------------

def reference_forward(token_ids, table, vec2vec_params, routing):
    b, s = token_ids.shape
    emb = table[token_ids.reshape(-1)]
    outputs = [emb]
    for i, (w, bi) in enumerate(vec2vec_params):
        outputs.append(outputs[routing[i]] @ w + bi)
    return [o.reshape(b, s, -1) for o in outputs]


if __name__ == "__main__":
    key = jax.random.PRNGKey(0)
    k_tab, k_ids, k_w0, k_b0, k_w1, k_b1 = jax.random.split(key, 6)

    batch, seq = 2, 8
    vocab, embed_dim, hidden = 64, 128, 128

    # deterministic parameter init
    table = jax.random.normal(k_tab, (vocab, embed_dim), dtype=jnp.float32) * 0.02
    w0 = jax.random.normal(k_w0, (embed_dim, hidden), dtype=jnp.float32) * 0.05
    b0 = jax.random.normal(k_b0, (hidden,), dtype=jnp.float32) * 0.01
    w1 = jax.random.normal(k_w1, (hidden, hidden), dtype=jnp.float32) * 0.05
    b1 = jax.random.normal(k_b1, (hidden,), dtype=jnp.float32) * 0.01

    vec2vec_params = [(w0, b0), (w1, b1)]
    routing = [0, 1]  # hop0 consumes the embedding, hop1 consumes hop0's output

    token_ids = jax.random.randint(k_ids, (batch, seq), 0, vocab, dtype=jnp.int32)

    model = MultiHopWordEmbedding(table, vec2vec_params, routing)
    outs = model.forward(token_ids)
    outs = [jax.block_until_ready(o) for o in outs]

    refs = reference_forward(token_ids, table, vec2vec_params, routing)
    assert len(outs) == len(refs) == 1 + len(vec2vec_params)
    for o, r in zip(outs, refs):
        assert o.shape == r.shape and o.dtype == r.dtype
        assert jnp.allclose(o, r, atol=1e-5, rtol=1e-5), "mismatch vs reference"

    print("KERNEL_OK")
</pallas_src>

<mosaic_0001>
module attributes {stable_mosaic.version = 11 : i64} {
  func.func @kernel(%arg0: i32, %arg1: memref<16xi32, #tpu.memory_space<smem>>, %arg2: memref<64x128xf32, #tpu.memory_space<any>>, %arg3: memref<128x128xf32, #tpu.memory_space<vmem>>, %arg4: memref<1x128xf32, #tpu.memory_space<vmem>>, %arg5: memref<128x128xf32, #tpu.memory_space<vmem>>, %arg6: memref<1x128xf32, #tpu.memory_space<vmem>>, %arg7: memref<16x128xf32, #tpu.memory_space<vmem>>, %arg8: memref<16x128xf32, #tpu.memory_space<vmem>>, %arg9: memref<16x128xf32, #tpu.memory_space<vmem>>, %arg10: memref<16x128xf32, #tpu.memory_space<vmem>>, %arg11: memref<!tpu.dma_semaphore, #tpu.memory_space<semaphore_mem>>) attributes {dimension_semantics = [#tpu.dimension_semantics<parallel>], iteration_bounds = array<i64: 1>, scalar_prefetch = 1 : i64, scratch_operands = 2 : i64, tpu.core_type = #tpu.core_type<tc>, window_params = [{}, {pipeline_mode = #tpu.pipeline_mode<synchronous>, transform_indices = @transform_1, window_bounds = array<i64: 128, 128>}, {pipeline_mode = #tpu.pipeline_mode<synchronous>, transform_indices = @transform_2, window_bounds = array<i64: 1, 128>}, {pipeline_mode = #tpu.pipeline_mode<synchronous>, transform_indices = @transform_3, window_bounds = array<i64: 128, 128>}, {pipeline_mode = #tpu.pipeline_mode<synchronous>, transform_indices = @transform_4, window_bounds = array<i64: 1, 128>}, {transform_indices = @transform_5, window_bounds = array<i64: 16, 128>}, {transform_indices = @transform_6, window_bounds = array<i64: 16, 128>}, {transform_indices = @transform_7, window_bounds = array<i64: 16, 128>}]} {
    %c16_i32 = arith.constant 16 : i32
    %0 = arith.muli %arg0, %c16_i32 : i32
    %c0_i32 = arith.constant 0 : i32
    %c16_i32_0 = arith.constant 16 : i32
    %1 = arith.addi %c0_i32, %c16_i32_0 : i32
    %c1_i32 = arith.constant 1 : i32
    scf.for %arg12 = %c0_i32 to %1 step %c1_i32  : i32 {
      %c1_i32_21 = arith.constant 1 : i32
      %17 = arith.muli %arg12, %c1_i32_21 : i32
      %c0_i32_22 = arith.constant 0 : i32
      %18 = arith.addi %c0_i32_22, %17 : i32
      %19 = arith.addi %0, %18 : i32
      %20 = arith.index_cast %19 : i32 to index
      %21 = memref.load %arg1[%20] : memref<16xi32, #tpu.memory_space<smem>>
      %c0_i32_23 = arith.constant 0 : i32
      %22 = arith.maxsi %21, %c0_i32_23 : i32
      %c63_i32 = arith.constant 63 : i32
      %23 = arith.minsi %22, %c63_i32 : i32
      %c0_i32_24 = arith.constant 0 : i32
      %24 = tpu.memref_slice %arg2[%23, %c0_i32_24] : memref<64x128xf32, #tpu.memory_space<any>> -> memref<1x128xf32, #tpu.memory_space<any>>
      %25 = tpu.memref_squeeze %24 : memref<1x128xf32, #tpu.memory_space<any>> -> memref<128xf32, #tpu.memory_space<any>>
      %c0_i32_25 = arith.constant 0 : i32
      %26 = tpu.memref_slice %arg10[%18, %c0_i32_25] : memref<16x128xf32, #tpu.memory_space<vmem>> -> memref<1x128xf32, #tpu.memory_space<vmem>>
      %27 = tpu.memref_squeeze %26 : memref<1x128xf32, #tpu.memory_space<vmem>> -> memref<128xf32, #tpu.memory_space<vmem>>
      tpu.enqueue_dma source(%25 : memref<128xf32, #tpu.memory_space<any>>) target(%27 : memref<128xf32, #tpu.memory_space<vmem>>) target_semaphore(%arg11 : memref<!tpu.dma_semaphore, #tpu.memory_space<semaphore_mem>>)
    }
    %c16_i32_1 = arith.constant 16 : i32
    %c0_i32_2 = arith.constant 0 : i32
    %c16_i32_3 = arith.constant 16 : i32
    %2 = arith.addi %c0_i32_2, %c16_i32_3 : i32
    %c1_i32_4 = arith.constant 1 : i32
    scf.for %arg12 = %c0_i32_2 to %2 step %c1_i32_4  : i32 {
      %c0_i32_21 = arith.constant 0 : i32
      %c0_i32_22 = arith.constant 0 : i32
      %c0_i32_23 = arith.constant 0 : i32
      %17 = tpu.memref_slice %arg2[%c0_i32_21, %c0_i32_23] : memref<64x128xf32, #tpu.memory_space<any>> -> memref<1x128xf32, #tpu.memory_space<any>>
      %18 = tpu.memref_squeeze %17 : memref<1x128xf32, #tpu.memory_space<any>> -> memref<128xf32, #tpu.memory_space<any>>
      %c0_i32_24 = arith.constant 0 : i32
      %19 = tpu.memref_slice %arg10[%c0_i32_22, %c0_i32_24] : memref<16x128xf32, #tpu.memory_space<vmem>> -> memref<1x128xf32, #tpu.memory_space<vmem>>
      %20 = tpu.memref_squeeze %19 : memref<1x128xf32, #tpu.memory_space<vmem>> -> memref<128xf32, #tpu.memory_space<vmem>>
      tpu.wait_dma2 semaphore(%arg11 : memref<!tpu.dma_semaphore, #tpu.memory_space<semaphore_mem>>) src(%18 : memref<128xf32, #tpu.memory_space<any>>) dst(%20 : memref<128xf32, #tpu.memory_space<vmem>>)
    }
    %c0 = arith.constant 0 : index
    %c0_5 = arith.constant 0 : index
    %3 = vector.load %arg10[%c0, %c0_5] : memref<16x128xf32, #tpu.memory_space<vmem>>, vector<16x128xf32>
    %c0_6 = arith.constant 0 : index
    %c0_7 = arith.constant 0 : index
    %4 = vector.load %arg7[%c0_6, %c0_7] : memref<16x128xf32, #tpu.memory_space<vmem>>, vector<16x128xf32>
    tpu.vector_store %arg7[%c0_6, %c0_7], %3 {strides = array<i32>} : memref<16x128xf32, #tpu.memory_space<vmem>>, vector<16x128xf32>,
    %c0_8 = arith.constant 0 : index
    %c0_9 = arith.constant 0 : index
    %5 = vector.load %arg3[%c0_8, %c0_9] : memref<128x128xf32, #tpu.memory_space<vmem>>, vector<128x128xf32>
    %cst = arith.constant dense<0.000000e+00> : vector<16x128xf32>
    %6 = tpu.matmul %3, %5, %cst {dimension_numbers = #tpu.dot_dimension_numbers<[1], [0], [0], [1], [0, 0, 1, 1], [], []>} : vector<16x128xf32>, vector<128x128xf32>, vector<16x128xf32> -> vector<16x128xf32>
    %c0_10 = arith.constant 0 : index
    %c0_11 = arith.constant 0 : index
    %7 = vector.load %arg4[%c0_10, %c0_11] : memref<1x128xf32, #tpu.memory_space<vmem>>, vector<1x128xf32>
    %8 = vector.broadcast %7 : vector<1x128xf32> to vector<16x128xf32>
    %9 = arith.addf %6, %8 : vector<16x128xf32>
    %c0_12 = arith.constant 0 : index
    %c0_13 = arith.constant 0 : index
    %10 = vector.load %arg8[%c0_12, %c0_13] : memref<16x128xf32, #tpu.memory_space<vmem>>, vector<16x128xf32>
    tpu.vector_store %arg8[%c0_12, %c0_13], %9 {strides = array<i32>} : memref<16x128xf32, #tpu.memory_space<vmem>>, vector<16x128xf32>,
    %c0_14 = arith.constant 0 : index
    %c0_15 = arith.constant 0 : index
    %11 = vector.load %arg5[%c0_14, %c0_15] : memref<128x128xf32, #tpu.memory_space<vmem>>, vector<128x128xf32>
    %cst_16 = arith.constant dense<0.000000e+00> : vector<16x128xf32>
    %12 = tpu.matmul %9, %11, %cst_16 {dimension_numbers = #tpu.dot_dimension_numbers<[1], [0], [0], [1], [0, 0, 1, 1], [], []>} : vector<16x128xf32>, vector<128x128xf32>, vector<16x128xf32> -> vector<16x128xf32>
    %c0_17 = arith.constant 0 : index
    %c0_18 = arith.constant 0 : index
    %13 = vector.load %arg6[%c0_17, %c0_18] : memref<1x128xf32, #tpu.memory_space<vmem>>, vector<1x128xf32>
    %14 = vector.broadcast %13 : vector<1x128xf32> to vector<16x128xf32>
    %15 = arith.addf %12, %14 : vector<16x128xf32>
    %c0_19 = arith.constant 0 : index
    %c0_20 = arith.constant 0 : index
    %16 = vector.load %arg9[%c0_19, %c0_20] : memref<16x128xf32, #tpu.memory_space<vmem>>, vector<16x128xf32>
    tpu.vector_store %arg9[%c0_19, %c0_20], %15 {strides = array<i32>} : memref<16x128xf32, #tpu.memory_space<vmem>>, vector<16x128xf32>,
    return
  }
  func.func @transform_1(%arg0: i32, %arg1: memref<16xi32, #tpu.memory_space<smem>>) -> (i32, i32) {
    %c0_i32 = arith.constant 0 : i32
    %c0_i32_0 = arith.constant 0 : i32
    %c0_i32_1 = arith.constant 0 : i32
    return %c0_i32, %c0_i32_0 : i32, i32
  }
  func.func @transform_2(%arg0: i32, %arg1: memref<16xi32, #tpu.memory_space<smem>>) -> (i32, i32) {
    %c0_i32 = arith.constant 0 : i32
    %c0_i32_0 = arith.constant 0 : i32
    %c0_i32_1 = arith.constant 0 : i32
    return %c0_i32, %c0_i32_0 : i32, i32
  }
  func.func @transform_3(%arg0: i32, %arg1: memref<16xi32, #tpu.memory_space<smem>>) -> (i32, i32) {
    %c0_i32 = arith.constant 0 : i32
    %c0_i32_0 = arith.constant 0 : i32
    %c0_i32_1 = arith.constant 0 : i32
    return %c0_i32, %c0_i32_0 : i32, i32
  }
  func.func @transform_4(%arg0: i32, %arg1: memref<16xi32, #tpu.memory_space<smem>>) -> (i32, i32) {
    %c0_i32 = arith.constant 0 : i32
    %c0_i32_0 = arith.constant 0 : i32
    %c0_i32_1 = arith.constant 0 : i32
    return %c0_i32, %c0_i32_0 : i32, i32
  }
  func.func @transform_5(%arg0: i32, %arg1: memref<16xi32, #tpu.memory_space<smem>>) -> (i32, i32) {
    %c0_i32 = arith.constant 0 : i32
    %c0_i32_0 = arith.constant 0 : i32
    return %arg0, %c0_i32 : i32, i32
  }
  func.func @transform_6(%arg0: i32, %arg1: memref<16xi32, #tpu.memory_space<smem>>) -> (i32, i32) {
    %c0_i32 = arith.constant 0 : i32
    %c0_i32_0 = arith.constant 0 : i32
    return %arg0, %c0_i32 : i32, i32
  }
  func.func @transform_7(%arg0: i32, %arg1: memref<16xi32, #tpu.memory_space<smem>>) -> (i32, i32) {
    %c0_i32 = arith.constant 0 : i32
    %c0_i32_0 = arith.constant 0 : i32
    return %arg0, %c0_i32 : i32, i32
  }
}

</mosaic_0001>

<llo_original>
// kernel: tpu_custom_call.1
$region0: #{tpu_custom_call.1}
  #allocation0 [shape = 'u32[]', space=smem, size = 0x4, offset = 0x4, fixed_abs, tag = 'smem constant byte address 0x4 - core index']
  #allocation1 [shape = 'u32[144,128]{1,0:T(1,128)}', space=vmem, size = 0x12000, scoped, tag = 'internal scratch']
  #allocation2 [shape = 'f32[16,128]{1,0:T(8,128)}', space=vmem, size = 0x2000, scoped, tag = 'scratch operand']
  #allocation3 [shape = 's32[1]{0}', space=sflag, size = 0x4, scoped, tag = 'scratch operand']
  #allocation4 [shape = 's32[1]{0}', space=sflag, size = 0x4, scoped, tag = 'scoped memory for tpu_custom_call.1']
  #allocation5 [shape = 'u8[512]{0}', space=smem, size = 0x200, scoped, tag = 'prefetched SMEM operand 0']
  #allocation15 [shape = 's32[]', space=sflag, size = 0x4, offset = 0, fixed_abs, tag = 'sflag constant byte address 0x0 - dummy sync flag']
  #allocation16 [shape = 's32[]', space=sflag, size = 0x4, offset = 0, fixed_abs, tag = 'sflag constant byte address 0x0 - dummy sync flag']
  #allocation17 [shape = 'u32[]', space=smem, size = 0x4, offset = 0x44, fixed_abs, tag = 'smem constant byte address 0x44 - assertion arg 0']
  #allocation18 [shape = 'u32[]', space=smem, size = 0x4, offset = 0x48, fixed_abs, tag = 'smem constant byte address 0x48 - assertion arg 1']
  %s0 = inlined_call_operand.hbm [shape: s32[16], index: 0, kind: input, shape index: {}]
  %s1 = inlined_call_operand.hbm [shape: f32[64,128], index: 1, kind: input, shape index: {}]
  %s2 = inlined_call_operand.hbm [shape: f32[128,128], index: 2, kind: input, shape index: {}]
  %s3 = inlined_call_operand.vmem [shape: f32[1,128], index: 3, kind: input, shape index: {}]
  %s4 = inlined_call_operand.hbm [shape: f32[128,128], index: 4, kind: input, shape index: {}]
  %s5 = inlined_call_operand.vmem [shape: f32[1,128], index: 5, kind: input, shape index: {}]
  %s6 = inlined_call_operand.hbm [shape: f32[16,128], index: 6, kind: output, shape index: {0}]
  %s7 = inlined_call_operand.hbm [shape: f32[16,128], index: 7, kind: output, shape index: {1}]
  %s8 = inlined_call_operand.hbm [shape: f32[16,128], index: 8, kind: output, shape index: {2}]
  %9 = xla_tuple %s6, %s7, %s8
  %s10 = sld [smem:[#allocation0]]
  $region68: #{tpu_custom_call.1} parent=0
    _
  %s12 = ssub.s32 1, %s10
  %s13 = scalar_select 0, %s12, %s10
  %15 = dma.hbm_to_smem %s0, 16, [#allocation5], [#allocation4]
  %16 = dma.done [#allocation4], 16
  %17 = sfence
  $region1: #{tpu_custom_call.1} parent=0
    #allocation6 [shape = 'u8[65536]{0}', space=vmem, size = 0x10000, scoped, tag = 'input window, operand 2, single buffered']
    #allocation7 [shape = 's32[1]{0}', space=sflag, size = 0x4, scoped, tag = 'scoped memory for tpu_custom_call.1']
    #allocation8 [shape = 's32[1]{0}', space=sflag, size = 0x4, scoped, tag = 'scoped memory for tpu_custom_call.1']
    #allocation9 [shape = 'u8[65536]{0}', space=vmem, size = 0x10000, scoped, tag = 'input window, operand 4, single buffered']
    #allocation10 [shape = 's32[1]{0}', space=sflag, size = 0x4, scoped, tag = 'scoped memory for tpu_custom_call.1']
    #allocation11 [shape = 'u8[8192]{0}', space=vmem, size = 0x2000, scoped, tag = 'output window, operand 0, single buffered']
    #allocation12 [shape = 'u8[8192]{0}', space=vmem, size = 0x2000, scoped, tag = 'output window, operand 1, single buffered']
    #allocation13 [shape = 's32[1]{0}', space=sflag, size = 0x4, scoped, tag = 'scoped memory for tpu_custom_call.1']
    #allocation14 [shape = 'u8[8192]{0}', space=vmem, size = 0x2000, scoped, tag = 'output window, operand 2, single buffered']
    %18 = vsyncpa [#allocation7], 0
    %19 = vsyncpa [#allocation10], 0
    %20 = vsyncpa [#allocation8], 0
    %21 = vsyncpa [#allocation13], 0
    // Predicated region
    $region2: #{tpu_custom_call.1} parent=1 // pred_check
      _
    $region3: #{tpu_custom_call.1} parent=1 // pred_check_branch
      %23 = sbr.rel (0) target = $region5
    $region4: #{tpu_custom_call.1} parent=1 // pred_region
      %s25 = ssub.s32 2048, 2048
      %26 = vsyncadd [#allocation7], %s25
      %s27 = sshll.u32 [#allocation6], 4
      %s28 = int_to_ptr.vmem [resolvable:$true] %s27
      %33 = dma.hbm_to_vmem [thread:$0]  %s2, 2048, %s28, [#allocation7], 128, 128, 8
    $region5: #{tpu_custom_call.1} parent=1 // pred_fallthru
      _
    // Predicated region
    $region6: #{tpu_custom_call.1} parent=1 // pred_check
      _
    $region7: #{tpu_custom_call.1} parent=1 // pred_check_branch
      %35 = sbr.rel (0) target = $region9
    $region8: #{tpu_custom_call.1} parent=1 // pred_region
      _
    $region9: #{tpu_custom_call.1} parent=1 // pred_fallthru
      _
    // Predicated region
    $region10: #{tpu_custom_call.1} parent=1 // pred_check
      _
    $region11: #{tpu_custom_call.1} parent=1 // pred_check_branch
      %37 = sbr.rel (0) target = $region13
    $region12: #{tpu_custom_call.1} parent=1 // pred_region
      %s39 = ssub.s32 2048, 2048
      %40 = vsyncadd [#allocation10], %s39
      %s41 = sshll.u32 [#allocation9], 4
      %s42 = int_to_ptr.vmem [resolvable:$true] %s41
      %47 = dma.hbm_to_vmem [thread:$0]  %s4, 2048, %s42, [#allocation10], 128, 128, 8
    $region13: #{tpu_custom_call.1} parent=1 // pred_fallthru
      _
    // Predicated region
    $region14: #{tpu_custom_call.1} parent=1 // pred_check
      _
    $region15: #{tpu_custom_call.1} parent=1 // pred_check_branch
      %49 = sbr.rel (0) target = $region17
    $region16: #{tpu_custom_call.1} parent=1 // pred_region
      _
    $region17: #{tpu_custom_call.1} parent=1 // pred_fallthru
      _
    // Predicated region
    $region18: #{tpu_custom_call.1} parent=1 // pred_check
      _
    $region19: #{tpu_custom_call.1} parent=1 // pred_check_branch
      %51 = sbr.rel (0) target = $region21
    $region20: #{tpu_custom_call.1} parent=1 // pred_region
      %52 = dma.done [#allocation7], 2048
    $region21: #{tpu_custom_call.1} parent=1 // pred_fallthru
      _
    // Predicated region
    $region22: #{tpu_custom_call.1} parent=1 // pred_check
      _
    $region23: #{tpu_custom_call.1} parent=1 // pred_check_branch
      %54 = sbr.rel (0) target = $region25
    $region24: #{tpu_custom_call.1} parent=1 // pred_region
      %55 = dma.done [#allocation10], 2048
    $region25: #{tpu_custom_call.1} parent=1 // pred_fallthru
      _
    %s56 = smul.u32 0, 16
    loop: start=0, step=1, limit=16
    $region26: #{tpu_custom_call.1} parent=1 // loop_pre_header
      _
    $region27: #{tpu_custom_call.1} parent=1 // loop_header
      %s58 = sphi 0, %s62
      %p59 = scmp.ge.s32.totalorder %s58, 16
    $region28: #{tpu_custom_call.1} parent=1 // loop_header_branch
      %61 = sbr.rel (%p59) target = $region32
    $region29: #{tpu_custom_call.1} parent=1 // loop_body
      %s63 = sadd.s32 %s56, %s58
      %s64 = sld [smem:[#allocation5 + %s63]]
      %p65 = scmp.gt.s32.totalorder %s64, 0
      %s66 = scalar_select %p65, %s64, 0
      %p67 = scmp.lt.s32.totalorder %s66, 63
      %s68 = scalar_select %p67, %s66, 63
      %s69 = smul.addr %s68, 16
      %s70 = scalar_lea.hbm %s1, %s69
      %s71 = scalar_lea.vmem [#allocation2], %s58
      // Predicated region
      $region33: #{tpu_custom_call.1} parent=29 // pred_check
        _
      $region34: #{tpu_custom_call.1} parent=29 // pred_check_branch
        %73 = sbr.rel target = $region36
      $region35: #{tpu_custom_call.1} parent=29 // pred_region
        %74 = sst [smem:[#allocation17]] [#allocation16]
        %75 = sst [smem:[#allocation18]] [#allocation15]
      $region36: #{tpu_custom_call.1} parent=29 // pred_fallthru
        _
      %77 = shalt.err (0)
      %s79 = sshll.u32 %s71, 4
      %s80 = int_to_ptr.vmem [resolvable:$true] %s79
      %82 = dma.hbm_to_vmem [thread:$0]  %s70, 16, %s80, [#allocation3]
    $region30: #{tpu_custom_call.1} parent=1 // loop_footer
      %s62 = sadd.s32 1, %s58
    $region31: #{tpu_custom_call.1} parent=1 // loop_footer_branch
      %57 = sbr.rel target = $region27
    $region32: #{tpu_custom_call.1} parent=1 // loop_exit
      _
    loop: start=0, step=1, limit=16
    $region37: #{tpu_custom_call.1} parent=1 // loop_pre_header
      _
    $region38: #{tpu_custom_call.1} parent=1 // loop_header
      %s84 = sphi 0, %s88
      %p85 = scmp.ge.s32.totalorder %s84, 16
    $region39: #{tpu_custom_call.1} parent=1 // loop_header_branch
      %87 = sbr.rel (%p85) target = $region43
    $region40: #{tpu_custom_call.1} parent=1 // loop_body
      %90 = dma.done [#allocation3], 16
    $region41: #{tpu_custom_call.1} parent=1 // loop_footer
      %s88 = sadd.s32 1, %s84
    $region42: #{tpu_custom_call.1} parent=1 // loop_footer_branch
      %83 = sbr.rel target = $region38
    $region43: #{tpu_custom_call.1} parent=1 // loop_exit
      _
    %v91 = vld [vmem:[#allocation2] sm:$0xff]
    %v92 = vld [vmem:[#allocation2 + $0x8] sm:$0xff]
    %93 = vst [vmem:[#allocation11] sm:$0xff] %v91
    %94 = vst [vmem:[#allocation11 + $0x8] sm:$0xff] %v92
    %v95 = vld [vmem:[#allocation6] sm:$0xff]
    %v96 = vld [vmem:[#allocation6 + $0x8] sm:$0xff]
    %v97 = vld [vmem:[#allocation6 + $0x10] sm:$0xff]
    %v98 = vld [vmem:[#allocation6 + $0x18] sm:$0xff]
    %v99 = vld [vmem:[#allocation6 + $0x20] sm:$0xff]
    %v100 = vld [vmem:[#allocation6 + $0x28] sm:$0xff]
    %v101 = vld [vmem:[#allocation6 + $0x30] sm:$0xff]
    %v102 = vld [vmem:[#allocation6 + $0x38] sm:$0xff]
    %v103 = vld [vmem:[#allocation6 + $0x40] sm:$0xff]
    %v104 = vld [vmem:[#allocation6 + $0x48] sm:$0xff]
    %v105 = vld [vmem:[#allocation6 + $0x50] sm:$0xff]
    %v106 = vld [vmem:[#allocation6 + $0x58] sm:$0xff]
    %v107 = vld [vmem:[#allocation6 + $0x60] sm:$0xff]
    %v108 = vld [vmem:[#allocation6 + $0x68] sm:$0xff]
    %v109 = vld [vmem:[#allocation6 + $0x70] sm:$0xff]
    %v110 = vld [vmem:[#allocation6 + $0x78] sm:$0xff]
    %v111 = vld [vmem:[%s3] sm:$0x1]
    %v113 = vlaneseq
    %v114 = vshrl.u32 %v113, 7
    %v115 = vsub.s32 0, %v114
    %v116 = vrot.slane %v111, %v115
    %118 = vmatprep.subr.mxu0 0.0
    %119 = vmatpush1.msra.mxu0 %v95
    %120 = vmatprep.subr.mxu0 0.0
    %121 = vmatpush1.msra.mxu0 %v96
    %122 = vmatprep.subr.mxu0 0.0
    %123 = vmatpush1.msra.mxu0 %v97
    %124 = vmatprep.subr.mxu0 0.0
    %125 = vmatpush1.msra.mxu0 %v98
    %126 = vmatprep.subr.mxu0 0.0
    %127 = vmatpush1.msra.mxu0 %v99
    %128 = vmatprep.subr.mxu0 0.0
    %129 = vmatpush1.msra.mxu0 %v100
    %130 = vmatprep.subr.mxu0 0.0
    %131 = vmatpush1.msra.mxu0 %v101
    %132 = vmatprep.subr.mxu0 0.0
    %133 = vmatpush1.msra.mxu0 %v102
    %134 = vmatprep.subr.mxu0 0.0
    %135 = vmatpush1.msra.mxu0 %v103
    %136 = vmatprep.subr.mxu0 0.0
    %137 = vmatpush1.msra.mxu0 %v104
    %138 = vmatprep.subr.mxu0 0.0
    %139 = vmatpush1.msra.mxu0 %v105
    %140 = vmatprep.subr.mxu0 0.0
    %141 = vmatpush1.msra.mxu0 %v106
    %142 = vmatprep.subr.mxu0 0.0
    %143 = vmatpush1.msra.mxu0 %v107
    %144 = vmatprep.subr.mxu0 0.0
    %145 = vmatpush1.msra.mxu0 %v108
    %146 = vmatprep.subr.mxu0 0.0
    %147 = vmatpush1.msra.mxu0 %v109
    %148 = vmatprep.subr.mxu0 0.0
    %149 = vmatpush1.msra.mxu0 %v110
    %150 = vmatprep.subr.mxu0 0.0
    %151 = vmatpush1.msra.mxu0 0.0
    %152 = vmatprep.subr.mxu0 0.0
    %153 = vmatpush1.msra.mxu0 0.0
    %154 = vmatprep.subr.mxu0 0.0
    %155 = vmatpush1.msra.mxu0 0.0
    %156 = vmatprep.subr.mxu0 0.0
    %157 = vmatpush1.msra.mxu0 0.0
    %158 = vmatprep.subr.mxu0 0.0
    %159 = vmatpush1.msra.mxu0 0.0
    %160 = vmatprep.subr.mxu0 0.0
    %161 = vmatpush1.msra.mxu0 0.0
    %162 = vmatprep.subr.mxu0 0.0
    %163 = vmatpush1.msra.mxu0 0.0
    %164 = vmatprep.subr.mxu0 0.0
    %165 = vmatpush1.msra.mxu0 0.0
    %166 = vmatprep.subr.mxu0 0.0
    %167 = vmatpush1.msra.mxu0 0.0
    %168 = vmatprep.subr.mxu0 0.0
    %169 = vmatpush1.msra.mxu0 0.0
    %170 = vmatprep.subr.mxu0 0.0
    %171 = vmatpush1.msra.mxu0 0.0
    %172 = vmatprep.subr.mxu0 0.0
    %173 = vmatpush1.msra.mxu0 0.0
    %174 = vmatprep.subr.mxu0 0.0
    %175 = vmatpush1.msra.mxu0 0.0
    %176 = vmatprep.subr.mxu0 0.0
    %177 = vmatpush1.msra.mxu0 0.0
    %178 = vmatprep.subr.mxu0 0.0
    %179 = vmatpush1.msra.mxu0 0.0
    %180 = vmatprep.subr.mxu0 0.0
    %181 = vmatpush1.msra.mxu0 0.0
    %182 = vmatprep.mubr.f32.mxu0 0.0
    %183 = vmatmul.mubr.f32.gmra.mrb[0].mxu0 %v91
    %v184 = vpop.f32.mrb[0].mxu0
    %v185 = vadd.f32 %v116, %v184
    %v186 = vpop.f32.mrb[0].mxu0
    %187 = vmatprep.mubr.f32.mxu0 0.0
    %188 = vmatmul.mubr.f32.gmra.mrb[0].mxu0 %v92
    %v189 = vpop.f32.mrb[0].mxu0
    %v190 = vadd.f32 %v116, %v189
    %v191 = vpop.f32.mrb[0].mxu0
    %192 = vdwg.mxu0
    %193 = vst [vmem:[#allocation12] sm:$0xff] %v185
    %194 = vst [vmem:[#allocation12 + $0x8] sm:$0xff] %v190
    %v195 = vld [vmem:[#allocation9] sm:$0xff]
    %v196 = vld [vmem:[#allocation9 + $0x8] sm:$0xff]
    %v197 = vld [vmem:[#allocation9 + $0x10] sm:$0xff]
    %v198 = vld [vmem:[#allocation9 + $0x18] sm:$0xff]
    %v199 = vld [vmem:[#allocation9 + $0x20] sm:$0xff]
    %v200 = vld [vmem:[#allocation9 + $0x28] sm:$0xff]
    %v201 = vld [vmem:[#allocation9 + $0x30] sm:$0xff]
    %v202 = vld [vmem:[#allocation9 + $0x38] sm:$0xff]
    %v203 = vld [vmem:[#allocation9 + $0x40] sm:$0xff]
    %v204 = vld [vmem:[#allocation9 + $0x48] sm:$0xff]
    %v205 = vld [vmem:[#allocation9 + $0x50] sm:$0xff]
    %v206 = vld [vmem:[#allocation9 + $0x58] sm:$0xff]
    %v207 = vld [vmem:[#allocation9 + $0x60] sm:$0xff]
    %v208 = vld [vmem:[#allocation9 + $0x68] sm:$0xff]
    %v209 = vld [vmem:[#allocation9 + $0x70] sm:$0xff]
    %v210 = vld [vmem:[#allocation9 + $0x78] sm:$0xff]
    %v211 = vld [vmem:[%s5] sm:$0x1]
    %v213 = vlaneseq
    %v214 = vshrl.u32 %v213, 7
    %v215 = vsub.s32 0, %v214
    %v216 = vrot.slane %v211, %v215
    %218 = vmatprep.subr.mxu0 0.0
    %219 = vmatpush1.msra.mxu0 %v195
    %220 = vmatprep.subr.mxu0 0.0
    %221 = vmatpush1.msra.mxu0 %v196
    %222 = vmatprep.subr.mxu0 0.0
    %223 = vmatpush1.msra.mxu0 %v197
    %224 = vmatprep.subr.mxu0 0.0
    %225 = vmatpush1.msra.mxu0 %v198
    %226 = vmatprep.subr.mxu0 0.0
    %227 = vmatpush1.msra.mxu0 %v199
    %228 = vmatprep.subr.mxu0 0.0
    %229 = vmatpush1.msra.mxu0 %v200
    %230 = vmatprep.subr.mxu0 0.0
    %231 = vmatpush1.msra.mxu0 %v201
    %232 = vmatprep.subr.mxu0 0.0
    %233 = vmatpush1.msra.mxu0 %v202
    %234 = vmatprep.subr.mxu0 0.0
    %235 = vmatpush1.msra.mxu0 %v203
    %236 = vmatprep.subr.mxu0 0.0
    %237 = vmatpush1.msra.mxu0 %v204
    %238 = vmatprep.subr.mxu0 0.0
    %239 = vmatpush1.msra.mxu0 %v205
    %240 = vmatprep.subr.mxu0 0.0
    %241 = vmatpush1.msra.mxu0 %v206
    %242 = vmatprep.subr.mxu0 0.0
    %243 = vmatpush1.msra.mxu0 %v207
    %244 = vmatprep.subr.mxu0 0.0
    %245 = vmatpush1.msra.mxu0 %v208
    %246 = vmatprep.subr.mxu0 0.0
    %247 = vmatpush1.msra.mxu0 %v209
    %248 = vmatprep.subr.mxu0 0.0
    %249 = vmatpush1.msra.mxu0 %v210
    %250 = vmatprep.subr.mxu0 0.0
    %251 = vmatpush1.msra.mxu0 0.0
    %252 = vmatprep.subr.mxu0 0.0
    %253 = vmatpush1.msra.mxu0 0.0
    %254 = vmatprep.subr.mxu0 0.0
    %255 = vmatpush1.msra.mxu0 0.0
    %256 = vmatprep.subr.mxu0 0.0
    %257 = vmatpush1.msra.mxu0 0.0
    %258 = vmatprep.subr.mxu0 0.0
    %259 = vmatpush1.msra.mxu0 0.0
    %260 = vmatprep.subr.mxu0 0.0
    %261 = vmatpush1.msra.mxu0 0.0
    %262 = vmatprep.subr.mxu0 0.0
    %263 = vmatpush1.msra.mxu0 0.0
    %264 = vmatprep.subr.mxu0 0.0
    %265 = vmatpush1.msra.mxu0 0.0
    %266 = vmatprep.subr.mxu0 0.0
    %267 = vmatpush1.msra.mxu0 0.0
    %268 = vmatprep.subr.mxu0 0.0
    %269 = vmatpush1.msra.mxu0 0.0
    %270 = vmatprep.subr.mxu0 0.0
    %271 = vmatpush1.msra.mxu0 0.0
    %272 = vmatprep.subr.mxu0 0.0
    %273 = vmatpush1.msra.mxu0 0.0
    %274 = vmatprep.subr.mxu0 0.0
    %275 = vmatpush1.msra.mxu0 0.0
    %276 = vmatprep.subr.mxu0 0.0
    %277 = vmatpush1.msra.mxu0 0.0
    %278 = vmatprep.subr.mxu0 0.0
    %279 = vmatpush1.msra.mxu0 0.0
    %280 = vmatprep.subr.mxu0 0.0
    %281 = vmatpush1.msra.mxu0 0.0
    %282 = vmatprep.mubr.f32.mxu0 0.0
    %283 = vmatmul.mubr.f32.gmra.mrb[0].mxu0 %v185
    %v284 = vpop.f32.mrb[0].mxu0
    %v285 = vadd.f32 %v216, %v284
    %v286 = vpop.f32.mrb[0].mxu0
    %287 = vmatprep.mubr.f32.mxu0 0.0
    %288 = vmatmul.mubr.f32.gmra.mrb[0].mxu0 %v190
    %v289 = vpop.f32.mrb[0].mxu0
    %v290 = vadd.f32 %v216, %v289
    %v291 = vpop.f32.mrb[0].mxu0
    %292 = vdwg.mxu0
    %293 = vst [vmem:[#allocation14] sm:$0xff] %v285
    %294 = vst [vmem:[#allocation14 + $0x8] sm:$0xff] %v290
    // Predicated region
    $region44: #{tpu_custom_call.1} parent=1 // pred_check
      _
    $region45: #{tpu_custom_call.1} parent=1 // pred_check_branch
      %296 = sbr.rel (0) target = $region47
    $region46: #{tpu_custom_call.1} parent=1 // pred_region
      %s298 = ssub.s32 256, 256
      %299 = vsyncadd [#allocation8], %s298
      %s300 = sshll.u32 [#allocation11], 4
      %s301 = int_to_ptr.vmem [resolvable:$true] %s300
      %306 = dma.vmem_to_hbm [thread:$0]  %s301, 256, %s6, [#allocation8], 128, 128, 8
    $region47: #{tpu_custom_call.1} parent=1 // pred_fallthru
      _
    // Predicated region
    $region48: #{tpu_custom_call.1} parent=1 // pred_check
      _
    $region49: #{tpu_custom_call.1} parent=1 // pred_check_branch
      %308 = sbr.rel (0) target = $region51
    $region50: #{tpu_custom_call.1} parent=1 // pred_region
      %s310 = ssub.s32 256, 256
      %311 = vsyncadd [#allocation13], %s310
      %s312 = sshll.u32 [#allocation12], 4
      %s313 = int_to_ptr.vmem [resolvable:$true] %s312
      %318 = dma.vmem_to_hbm [thread:$0]  %s313, 256, %s7, [#allocation13], 128, 128, 8
    $region51: #{tpu_custom_call.1} parent=1 // pred_fallthru
      _
    // Predicated region
    $region52: #{tpu_custom_call.1} parent=1 // pred_check
      _
    $region53: #{tpu_custom_call.1} parent=1 // pred_check_branch
      %320 = sbr.rel (0) target = $region55
    $region54: #{tpu_custom_call.1} parent=1 // pred_region
      %s322 = ssub.s32 256, 256
      %323 = vsyncadd [#allocation13], %s322
      %s324 = sshll.u32 [#allocation14], 4
      %s325 = int_to_ptr.vmem [resolvable:$true] %s324
      %330 = dma.vmem_to_hbm [thread:$0]  %s325, 256, %s8, [#allocation13], 128, 128, 8
    $region55: #{tpu_custom_call.1} parent=1 // pred_fallthru
      _
    // Predicated region
    $region56: #{tpu_custom_call.1} parent=1 // pred_check
      _
    $region57: #{tpu_custom_call.1} parent=1 // pred_check_branch
      %332 = sbr.rel (0) target = $region59
    $region58: #{tpu_custom_call.1} parent=1 // pred_region
      %333 = dma.done [#allocation8], 256
    $region59: #{tpu_custom_call.1} parent=1 // pred_fallthru
      _
    // Predicated region
    $region60: #{tpu_custom_call.1} parent=1 // pred_check
      _
    $region61: #{tpu_custom_call.1} parent=1 // pred_check_branch
      %335 = sbr.rel (0) target = $region63
    $region62: #{tpu_custom_call.1} parent=1 // pred_region
      %336 = dma.done [#allocation13], 256
    $region63: #{tpu_custom_call.1} parent=1 // pred_fallthru
      _
    // Predicated region
    $region64: #{tpu_custom_call.1} parent=1 // pred_check
      _
    $region65: #{tpu_custom_call.1} parent=1 // pred_check_branch
      %338 = sbr.rel (0) target = $region67
    $region66: #{tpu_custom_call.1} parent=1 // pred_region
      %339 = dma.done [#allocation13], 256
    $region67: #{tpu_custom_call.1} parent=1 // pred_fallthru
      _
    %340 = vsyncpa [#allocation7], 1
    %341 = vsyncpa [#allocation10], 1
    %342 = vsyncpa [#allocation8], 1
    %343 = vsyncpa [#allocation13], 1
  %344 = vsyncmov [#allocation3]
  %s345 = vpop.sfrf %344
  %p346 = scmp.eq.s32.totalorder %s345, 0
  %p347 = pneg %p346
  %349 = shalt.err (%p347)

</llo_original>
